<compile_context>
chip_gen: v6e
topology: v6e:2x2x1
jax: 0.10.0
libtpu: 0.0.40
codegen_flags: <defaults>
</compile_context>

<pallas_src>
import jax
import jax.numpy as jnp
import numpy as np
from jax.experimental import pallas as pl
from jax.experimental.pallas import tpu as pltpu

_EPS = 1e-12
_NEG_INF = -1e30


# ----------------------------------------------------------------------------
# Kernels (all normalization / scaling / transposition pre-done in the wrapper)
# ----------------------------------------------------------------------------
def _infonce_self_kernel(q_ref, p_ref, kt_ref, bias_ref, loss_ref):
    """negative_keys=None: logits = qn @ pn.T / T, labels = arange(N)."""
    q = q_ref[...]                                     # (TM, D) normalized * 1/T
    p = p_ref[...]                                     # (TM, D) normalized
    # (TM, D) x (D, Npad) -> f32 logits; Npad is the lane-dense output dim.
    logits = jnp.dot(q, kt_ref[...], preferred_element_type=jnp.float32)
    logits = logits + bias_ref[...]                    # {0, -1e30} column mask
    # diag(qn @ pn.T)/T restricted to this row tile — no (N, N) masking.
    diag = jnp.sum(q.astype(jnp.float32) * p.astype(jnp.float32),
                   axis=-1, keepdims=True)             # (TM, 1)
    m = jnp.max(logits, axis=-1, keepdims=True)
    lse = jnp.log(jnp.sum(jnp.exp(logits - m), axis=-1, keepdims=True)) + m
    loss_ref[...] = lse - diag                         # per-row CE loss


def _infonce_unpaired_kernel(q_ref, p_ref, nkt_ref, loss_ref):
    """'unpaired' negatives: logits = [sum(qn*pn,-1), qn @ nk.T], labels = 0."""
    q = q_ref[...]                                     # (TM, D) normalized * 1/T
    p = p_ref[...]                                     # (TM, D) normalized
    pos = jnp.sum(q.astype(jnp.float32) * p.astype(jnp.float32),
                  axis=-1, keepdims=True)              # (TM, 1) already / T
    neg = jnp.dot(q, nkt_ref[...], preferred_element_type=jnp.float32)  # (TM, M)
    # logsumexp over the concatenated row [pos, neg] without materializing it.
    m = jnp.maximum(pos, jnp.max(neg, axis=-1, keepdims=True))
    lse = jnp.log(jnp.exp(pos - m)
                  + jnp.sum(jnp.exp(neg - m), axis=-1, keepdims=True)) + m
    loss_ref[...] = lse - pos                          # target index 0


# ----------------------------------------------------------------------------
# Wrapper
# ----------------------------------------------------------------------------
def _l2_normalize_xla(x):
    # Exact F.normalize semantics: x / max(||x||, 1e-12), in f32.
    x = x.astype(jnp.float32)
    n = jnp.sqrt(jnp.sum(x * x, axis=-1, keepdims=True))
    return x / jnp.maximum(n, _EPS)


def _pad_rows(x, n_pad):
    pad = n_pad - x.shape[0]
    return jnp.pad(x, ((0, pad), (0, 0))) if pad > 0 else x


def _resident_spec(shape):
    # Constant index_map -> the block never changes; single-buffer it so the
    # largest VMEM operand is not duplicated by the pipeline.
    try:
        return pl.BlockSpec(shape, lambda i: (0, 0), pipeline_mode=pl.Buffered(1))
    except (TypeError, AttributeError):
        return pl.BlockSpec(shape, lambda i: (0, 0))


def info_nce_pallas(query, positive_key, negative_keys=None, *,
                    temperature=0.1, reduction="mean", block_rows=256,
                    mxu_dtype=jnp.bfloat16):
    """InfoNCE loss. query/positive_key: (N, D); negative_keys: (M, D) or None.

    mxu_dtype: operand dtype fed to the MXU (bf16 default; jnp.float32 for
    f32-exact logits). Accumulation is always f32.
    """
    if query.ndim != 2 or positive_key.ndim != 2:
        raise ValueError("<query> and <positive_key> must be 2-D (N, D).")
    if query.shape != positive_key.shape:
        raise ValueError("<query> and <positive_key> must have the same shape.")
    if negative_keys is not None:
        if negative_keys.ndim != 2:
            # TODO(synk): negative_mode='paired' (3-D negative_keys) not implemented.
            raise NotImplementedError("'paired' (3-D) negative_keys not implemented.")
        if negative_keys.shape[-1] != query.shape[-1]:
            raise ValueError("<negative_keys> must have the same embedding dim.")
    if reduction not in ("mean", "sum", "none"):
        raise ValueError("reduction must be 'mean', 'sum' or 'none'.")

    N, D = query.shape
    inv_temp = 1.0 / float(temperature)

    # One-shot O(N*D) XLA pre-pass: normalize, fold 1/T into the query, cast
    # to the MXU dtype.  Heavy O(N^2 D) / O(N M D) work stays in the kernel.
    qn = (_l2_normalize_xla(query) * inv_temp).astype(mxu_dtype)
    pn = _l2_normalize_xla(positive_key).astype(mxu_dtype)

    block_rows = max(8, (int(block_rows) // 8) * 8)    # sublane-aligned tiles
    if N <= block_rows:
        tm, n_pad = N, N
    else:
        tm = block_rows
        n_pad = int(pl.cdiv(N, tm)) * tm
    grid = (n_pad // tm,)

    qn = _pad_rows(qn, n_pad)
    pn = _pad_rows(pn, n_pad)

    row_spec = pl.BlockSpec((tm, D), lambda i: (i, 0))
    out_spec = pl.BlockSpec((tm, 1), lambda i: (i, 0))
    out_shape = jax.ShapeDtypeStruct((n_pad, 1), jnp.float32)

    itm = jnp.dtype(mxu_dtype).itemsize
    n_cols = n_pad if negative_keys is None else int(negative_keys.shape[0])
    vmem_est = (D * n_cols * itm            # resident keys (single-buffered)
                + 4 * tm * D * itm          # q, p row tiles (double-buffered)
                + 4 * tm * n_cols * 4       # f32 logits + softmax temporaries
                + n_cols * 4 + 2 * tm * 4 + (1 << 20))
    cparams = pltpu.CompilerParams(
        dimension_semantics=("parallel",),  # megacore-friendly on v7x
        vmem_limit_bytes=int(min(max(vmem_est, 32 * 2**20), 100 * 2**20)))

    if negative_keys is None:
        kT = jnp.transpose(pn)                               # (D, Npad), lane-dense N
        bias = jnp.where(jnp.arange(n_pad) < N, 0.0,
                         _NEG_INF).astype(jnp.float32)[None, :]   # (1, Npad)
        loss2d = pl.pallas_call(
            _infonce_self_kernel,
            out_shape=out_shape,
            grid=grid,
            in_specs=[row_spec, row_spec,
                      _resident_spec((D, n_pad)),
                      _resident_spec((1, n_pad))],
            out_specs=out_spec,
            compiler_params=cparams,
        )(qn, pn, kT, bias)
    else:
        M = int(negative_keys.shape[0])
        nkT = jnp.transpose(_l2_normalize_xla(negative_keys).astype(mxu_dtype))  # (D, M)
        loss2d = pl.pallas_call(
            _infonce_unpaired_kernel,
            out_shape=out_shape,
            grid=grid,
            in_specs=[row_spec, row_spec, _resident_spec((D, M))],
            out_specs=out_spec,
            compiler_params=cparams,
        )(qn, pn, nkT)

    per_row = loss2d[:N, 0]          # drop padded query rows
    if reduction == "mean":
        return jnp.mean(per_row)
    if reduction == "sum":
        return jnp.sum(per_row)
    return per_row                   # reduction='none'


# ----------------------------------------------------------------------------
# Pure-JAX reference (mirrors the torch info_nce forward exactly).
# ----------------------------------------------------------------------------
def _info_nce_ref(query, positive_key, negative_keys=None, temperature=0.1):
    def norm(x):
        n = jnp.sqrt(jnp.sum(x * x, axis=-1, keepdims=True))
        return x / jnp.maximum(n, _EPS)
    qn = norm(query.astype(jnp.float32))
    pn = norm(positive_key.astype(jnp.float32))
    if negative_keys is None:
        logits = qn @ pn.T
        labels = jnp.arange(qn.shape[0])
    else:
        nn_ = norm(negative_keys.astype(jnp.float32))
        pos = jnp.sum(qn * pn, axis=-1, keepdims=True)
        neg = qn @ nn_.T
        logits = jnp.concatenate([pos, neg], axis=1)
        labels = jnp.zeros(qn.shape[0], dtype=jnp.int32)
    logits = logits / temperature
    logp = jax.nn.log_softmax(logits, axis=-1)
    nll = -jnp.take_along_axis(logp, labels[:, None], axis=1)[:, 0]
    return jnp.mean(nll)


if __name__ == "__main__":
    key = jax.random.PRNGKey(0)
    k1, k2, k3, k4, k5 = jax.random.split(key, 5)

    N, D, M = 8, 32, 16
    query = jax.random.normal(k1, (N, D), dtype=jnp.float32)
    positive_key = jax.random.normal(k2, (N, D), dtype=jnp.float32)
    negative_keys = jax.random.normal(k3, (M, D), dtype=jnp.float32)

    # --- negative_keys=None (module default config) ---
    ref = _info_nce_ref(query, positive_key, None, temperature=0.1)
    loss_f32 = info_nce_pallas(query, positive_key, None, temperature=0.1,
                               mxu_dtype=jnp.float32)          # f32-exact path
    jax.block_until_ready(loss_f32)
    np.testing.assert_allclose(np.asarray(loss_f32), np.asarray(ref),
                               rtol=1e-5, atol=1e-5)
    loss_bf16 = info_nce_pallas(query, positive_key, None, temperature=0.1)
    jax.block_until_ready(loss_bf16)                           # default bf16 MXU path
    np.testing.assert_allclose(np.asarray(loss_bf16), np.asarray(ref),
                               rtol=5e-2, atol=1e-2)

    # --- 'unpaired' negatives ---
    ref_neg = _info_nce_ref(query, positive_key, negative_keys, temperature=0.1)
    loss_neg_f32 = info_nce_pallas(query, positive_key, negative_keys,
                                   temperature=0.1, mxu_dtype=jnp.float32)
    jax.block_until_ready(loss_neg_f32)
    np.testing.assert_allclose(np.asarray(loss_neg_f32), np.asarray(ref_neg),
                               rtol=1e-5, atol=1e-5)
    loss_neg_bf16 = info_nce_pallas(query, positive_key, negative_keys,
                                    temperature=0.1)
    jax.block_until_ready(loss_neg_bf16)
    np.testing.assert_allclose(np.asarray(loss_neg_bf16), np.asarray(ref_neg),
                               rtol=5e-2, atol=1e-2)

    # --- row-tiled grid (grid > 1, remainder padding) at small shapes ---
    N2 = 20
    q2 = jax.random.normal(k4, (N2, D), dtype=jnp.float32)
    p2 = jax.random.normal(k5, (N2, D), dtype=jnp.float32)
    ref2 = _info_nce_ref(q2, p2, None, temperature=0.1)
    loss_t = info_nce_pallas(q2, p2, None, temperature=0.1, block_rows=8,
                             mxu_dtype=jnp.float32)
    jax.block_until_ready(loss_t)
    np.testing.assert_allclose(np.asarray(loss_t), np.asarray(ref2),
                               rtol=1e-5, atol=1e-5)
    ref2n = _info_nce_ref(q2, p2, negative_keys, temperature=0.1)
    loss_tn = info_nce_pallas(q2, p2, negative_keys, temperature=0.1,
                              block_rows=8, mxu_dtype=jnp.float32)
    jax.block_until_ready(loss_tn)
    np.testing.assert_allclose(np.asarray(loss_tn), np.asarray(ref2n),
                               rtol=1e-5, atol=1e-5)
    loss_tb = info_nce_pallas(q2, p2, None, temperature=0.1, block_rows=8)
    jax.block_until_ready(loss_tb)                              # padded bf16 path
    np.testing.assert_allclose(np.asarray(loss_tb), np.asarray(ref2),
                               rtol=5e-2, atol=1e-2)

    # --- reduction='sum' / 'none' ---
    loss_sum = info_nce_pallas(query, positive_key, None, temperature=0.1,
                               reduction="sum", mxu_dtype=jnp.float32)
    jax.block_until_ready(loss_sum)
    np.testing.assert_allclose(np.asarray(loss_sum), np.asarray(ref) * N,
                               rtol=1e-5, atol=1e-4)
    loss_none = info_nce_pallas(query, positive_key, None, temperature=0.1,
                                reduction="none", mxu_dtype=jnp.float32)
    jax.block_until_ready(loss_none)
    np.testing.assert_allclose(np.asarray(jnp.mean(loss_none)), np.asarray(ref),
                               rtol=1e-5, atol=1e-5)

    print("KERNEL_OK")
</pallas_src>

<mosaic_0001>
module attributes {stable_mosaic.version = 11 : i64} {
  func.func @_infonce_self_kernel(%arg0: i32, %arg1: memref<8x32xf32, #tpu.memory_space<vmem>>, %arg2: memref<8x32xf32, #tpu.memory_space<vmem>>, %arg3: memref<32x8xf32, #tpu.memory_space<vmem>>, %arg4: memref<1x8xf32, #tpu.memory_space<vmem>>, %arg5: memref<8x1xf32, #tpu.memory_space<vmem>>) attributes {dimension_semantics = [#tpu.dimension_semantics<parallel>], iteration_bounds = array<i64: 1>, scalar_prefetch = 0 : i64, scratch_operands = 0 : i64, tpu.core_type = #tpu.core_type<tc>, window_params = [{transform_indices = @transform_0, window_bounds = array<i64: 8, 32>}, {transform_indices = @transform_1, window_bounds = array<i64: 8, 32>}, {pipeline_mode = #tpu.pipeline_mode<synchronous>, transform_indices = @transform_2, window_bounds = array<i64: 32, 8>}, {pipeline_mode = #tpu.pipeline_mode<synchronous>, transform_indices = @transform_3, window_bounds = array<i64: 1, 8>}, {transform_indices = @transform_4, window_bounds = array<i64: 8, 1>}]} {
    %c0 = arith.constant 0 : index
    %c0_0 = arith.constant 0 : index
    %0 = vector.load %arg1[%c0, %c0_0] : memref<8x32xf32, #tpu.memory_space<vmem>>, vector<8x32xf32>
    %c0_1 = arith.constant 0 : index
    %c0_2 = arith.constant 0 : index
    %1 = vector.load %arg2[%c0_1, %c0_2] : memref<8x32xf32, #tpu.memory_space<vmem>>, vector<8x32xf32>
    %c0_3 = arith.constant 0 : index
    %c0_4 = arith.constant 0 : index
    %2 = vector.load %arg3[%c0_3, %c0_4] : memref<32x8xf32, #tpu.memory_space<vmem>>, vector<32x8xf32>
    %cst = arith.constant dense<0.000000e+00> : vector<8x8xf32>
    %3 = tpu.matmul %0, %2, %cst {dimension_numbers = #tpu.dot_dimension_numbers<[1], [0], [0], [1], [0, 0, 1, 1], [], []>} : vector<8x32xf32>, vector<32x8xf32>, vector<8x8xf32> -> vector<8x8xf32>
    %c0_5 = arith.constant 0 : index
    %c0_6 = arith.constant 0 : index
    %4 = vector.load %arg4[%c0_5, %c0_6] : memref<1x8xf32, #tpu.memory_space<vmem>>, vector<1x8xf32>
    %5 = vector.broadcast %4 : vector<1x8xf32> to vector<8x8xf32>
    %6 = arith.addf %3, %5 : vector<8x8xf32>
    %7 = arith.mulf %0, %1 : vector<8x32xf32>
    %cst_7 = arith.constant dense<0.000000e+00> : vector<8xf32>
    %8 = vector.multi_reduction <add>, %7, %cst_7 [1] : vector<8x32xf32> to vector<8xf32>
    %9 = vector.shape_cast %8 : vector<8xf32> to vector<8x1xf32>
    %cst_8 = arith.constant dense<0xFF800000> : vector<8xf32>
    %10 = vector.multi_reduction <maximumf>, %6, %cst_8 [1] : vector<8x8xf32> to vector<8xf32>
    %11 = vector.shape_cast %10 : vector<8xf32> to vector<8x1xf32>
    %12 = vector.broadcast %11 : vector<8x1xf32> to vector<8x8xf32>
    %13 = arith.subf %6, %12 : vector<8x8xf32>
    %14 = math.exp %13 : vector<8x8xf32>
    %cst_9 = arith.constant dense<0.000000e+00> : vector<8xf32>
    %15 = vector.multi_reduction <add>, %14, %cst_9 [1] : vector<8x8xf32> to vector<8xf32>
    %16 = vector.shape_cast %15 : vector<8xf32> to vector<8x1xf32>
    %17 = math.log %16 : vector<8x1xf32>
    %18 = arith.addf %17, %11 : vector<8x1xf32>
    %19 = arith.subf %18, %9 : vector<8x1xf32>
    %c0_10 = arith.constant 0 : index
    %c0_11 = arith.constant 0 : index
    %20 = vector.load %arg5[%c0_10, %c0_11] : memref<8x1xf32, #tpu.memory_space<vmem>>, vector<8x1xf32>
    tpu.vector_store %arg5[%c0_10, %c0_11], %19 {strides = array<i32>} : memref<8x1xf32, #tpu.memory_space<vmem>>, vector<8x1xf32>,
    return
  }
  func.func @transform_0(%arg0: i32) -> (i32, i32) {
    %c0_i32 = arith.constant 0 : i32
    %c0_i32_0 = arith.constant 0 : i32
    return %arg0, %c0_i32 : i32, i32
  }
  func.func @transform_1(%arg0: i32) -> (i32, i32) {
    %c0_i32 = arith.constant 0 : i32
    %c0_i32_0 = arith.constant 0 : i32
    return %arg0, %c0_i32 : i32, i32
  }
  func.func @transform_2(%arg0: i32) -> (i32, i32) {
    %c0_i32 = arith.constant 0 : i32
    %c0_i32_0 = arith.constant 0 : i32
    %c0_i32_1 = arith.constant 0 : i32
    return %c0_i32, %c0_i32_0 : i32, i32
  }
  func.func @transform_3(%arg0: i32) -> (i32, i32) {
    %c0_i32 = arith.constant 0 : i32
    %c0_i32_0 = arith.constant 0 : i32
    %c0_i32_1 = arith.constant 0 : i32
    return %c0_i32, %c0_i32_0 : i32, i32
  }
  func.func @transform_4(%arg0: i32) -> (i32, i32) {
    %c0_i32 = arith.constant 0 : i32
    %c0_i32_0 = arith.constant 0 : i32
    return %arg0, %c0_i32 : i32, i32
  }
}

</mosaic_0001>

<llo_original>
// kernel: tpu_custom_call.1
$region0: #{tpu_custom_call.1}
  #allocation0 [shape = 'u32[]', space=smem, size = 0x4, offset = 0x4, fixed_abs, tag = 'smem constant byte address 0x4 - core index']
  #allocation1 [shape = 'u32[144,128]{1,0:T(1,128)}', space=vmem, size = 0x12000, scoped, tag = 'internal scratch']
  %s0 = inlined_call_operand.vmem [shape: f32[8,32], index: 0, kind: input, shape index: {}]
  %s1 = inlined_call_operand.vmem [shape: f32[8,32], index: 1, kind: input, shape index: {}]
  %s2 = inlined_call_operand.vmem [shape: f32[32,8], index: 2, kind: input, shape index: {}]
  %s3 = inlined_call_operand.vmem [shape: f32[1,8], index: 3, kind: input, shape index: {}]
  %s4 = inlined_call_operand.vmem [shape: f32[8,1], index: 4, kind: output, shape index: {}]
  %s5 = sld [smem:[#allocation0]]
  $region26: #{tpu_custom_call.1} parent=0
    _
  %s7 = ssub.s32 1, %s5
  %s8 = scalar_select 0, %s7, %s5
  // Predicated region
  $region2: #{tpu_custom_call.1} parent=0 // pred_check
    _
  $region3: #{tpu_custom_call.1} parent=0 // pred_check_branch
    %10 = sbr.rel (0) target = $region5
  $region4: #{tpu_custom_call.1} parent=0 // pred_region
    _
  $region5: #{tpu_custom_call.1} parent=0 // pred_fallthru
    _
  // Predicated region
  $region6: #{tpu_custom_call.1} parent=0 // pred_check
    _
  $region7: #{tpu_custom_call.1} parent=0 // pred_check_branch
    %12 = sbr.rel (0) target = $region9
  $region8: #{tpu_custom_call.1} parent=0 // pred_region
    _
  $region9: #{tpu_custom_call.1} parent=0 // pred_fallthru
    _
  // Predicated region
  $region10: #{tpu_custom_call.1} parent=0 // pred_check
    _
  $region11: #{tpu_custom_call.1} parent=0 // pred_check_branch
    %14 = sbr.rel (0) target = $region13
  $region12: #{tpu_custom_call.1} parent=0 // pred_region
    _
  $region13: #{tpu_custom_call.1} parent=0 // pred_fallthru
    _
  // Predicated region
  $region14: #{tpu_custom_call.1} parent=0 // pred_check
    _
  $region15: #{tpu_custom_call.1} parent=0 // pred_check_branch
    %16 = sbr.rel (0) target = $region17
  $region16: #{tpu_custom_call.1} parent=0 // pred_region
    _
  $region17: #{tpu_custom_call.1} parent=0 // pred_fallthru
    _
  %v17 = vld [vmem:[%s0] sm:$0xff]
  %v18 = vld [vmem:[%s1] sm:$0xff]
  %v19 = vld [vmem:[%s2] sm:$0xff]
  %v20 = vld [vmem:[%s2 + $0x8] sm:$0xff]
  %v21 = vld [vmem:[%s2 + $0x10] sm:$0xff]
  %v22 = vld [vmem:[%s2 + $0x18] sm:$0xff]
  %v23 = vld [vmem:[%s3] sm:$0x1]
  %v25 = vlaneseq
  %v26 = vshrl.u32 %v25, 7
  %v27 = vsub.s32 0, %v26
  %v28 = vrot.slane %v23, %v27
  %vm30 = vcmask 261120
  %v32 = vsel %vm30, %v17, 0
  %34 = vmatprep.subr.mxu0 0.0
  %35 = vmatpush1.msra.mxu0 0.0
  %36 = vmatprep.subr.mxu0 0.0
  %37 = vmatpush1.msra.mxu0 0.0
  %38 = vmatprep.subr.mxu0 0.0
  %39 = vmatpush1.msra.mxu0 0.0
  %40 = vmatprep.subr.mxu0 0.0
  %41 = vmatpush1.msra.mxu0 0.0
  %42 = vmatprep.subr.mxu0 0.0
  %43 = vmatpush1.msra.mxu0 0.0
  %44 = vmatprep.subr.mxu0 0.0
  %45 = vmatpush1.msra.mxu0 0.0
  %46 = vmatprep.subr.mxu0 0.0
  %47 = vmatpush1.msra.mxu0 0.0
  %48 = vmatprep.subr.mxu0 0.0
  %49 = vmatpush1.msra.mxu0 0.0
  %50 = vmatprep.subr.mxu0 0.0
  %51 = vmatpush1.msra.mxu0 0.0
  %52 = vmatprep.subr.mxu0 0.0
  %53 = vmatpush1.msra.mxu0 0.0
  %54 = vmatprep.subr.mxu0 0.0
  %55 = vmatpush1.msra.mxu0 0.0
  %56 = vmatprep.subr.mxu0 0.0
  %57 = vmatpush1.msra.mxu0 0.0
  %58 = vmatprep.subr.mxu0 0.0
  %59 = vmatpush1.msra.mxu0 %v22
  %60 = vmatprep.subr.mxu0 0.0
  %61 = vmatpush1.msra.mxu0 %v21
  %62 = vmatprep.subr.mxu0 0.0
  %63 = vmatpush1.msra.mxu0 %v20
  %64 = vmatprep.subr.mxu0 0.0
  %65 = vmatpush1.msra.mxu0 %v19
  %66 = vmatprep.subr.mxu0 0.0
  %67 = vmatpush2.msra.mxu0 0.0
  %68 = vmatprep.subr.mxu0 0.0
  %69 = vmatpush2.msra.mxu0 0.0
  %70 = vmatprep.subr.mxu0 0.0
  %71 = vmatpush2.msra.mxu0 0.0
  %72 = vmatprep.subr.mxu0 0.0
  %73 = vmatpush2.msra.mxu0 0.0
  %74 = vmatprep.subr.mxu0 0.0
  %75 = vmatpush2.msra.mxu0 0.0
  %76 = vmatprep.subr.mxu0 0.0
  %77 = vmatpush2.msra.mxu0 0.0
  %78 = vmatprep.subr.mxu0 0.0
  %79 = vmatpush2.msra.mxu0 0.0
  %80 = vmatprep.subr.mxu0 0.0
  %81 = vmatpush2.msra.mxu0 0.0
  %82 = vmatprep.subr.mxu0 0.0
  %83 = vmatpush2.msra.mxu0 0.0
  %84 = vmatprep.subr.mxu0 0.0
  %85 = vmatpush2.msra.mxu0 0.0
  %86 = vmatprep.subr.mxu0 0.0
  %87 = vmatpush2.msra.mxu0 0.0
  %88 = vmatprep.subr.mxu0 0.0
  %89 = vmatpush2.msra.mxu0 0.0
  %90 = vmatprep.subr.mxu0 0.0
  %91 = vmatpush2.msra.mxu0 0.0
  %92 = vmatprep.subr.mxu0 0.0
  %93 = vmatpush2.msra.mxu0 0.0
  %94 = vmatprep.subr.mxu0 0.0
  %95 = vmatpush2.msra.mxu0 0.0
  %96 = vmatprep.subr.mxu0 0.0
  %97 = vmatpush2.msra.mxu0 0.0
  %98 = vmatprep.mubr.f32.mxu0 0.0
  %99 = vmatmul.mubr.f32.gmra.mxu0 %v32
  %v100 = vpop.f32.mrf.mxu0
  %v101 = vadd.f32 %v28, %v100
  %v102 = vpop.f32.mrf.mxu0
  %103 = vdwg.mxu0
  %v104 = vmul.f32 %v17, %v18
  %v105 = vsel %vm30, %v104, 0.0
  %106 = vadd.xlane.f32.xlu0 %v105
  %v107 = vpop.xlane.xlu0 %106
  %vm108 = vcmask 64512
  %v109 = vsel %vm108, %v101, -inf
  %110 = vmax.xlane.f32.xlu0 %v109
  %v111 = vpop.xlane.xlu0 %110
  %v112 = vsub.f32 %v101, %v111
  %v113 = vmul.f32 %v112, 1.442695
  %v114 = vpow.pop %v113
  %v115 = vsel %vm108, %v114, 0.0
  %116 = vadd.xlane.f32.xlu0 %v115
  %v117 = vpop.xlane.xlu0 %116
  %v118 = vlog2.pop %v117
  %v119 = vmul.f32 %v118, 0.6931472
  %v120 = vadd.f32 %v119, %v111
  %v121 = vsub.f32 %v120, %v107
  %vm122 = vcmask 7168
  %123 = vst.msk [vmem:[%s4] sm:$0xff] %vm122, %v121
  // Predicated region
  $region18: #{tpu_custom_call.1} parent=0 // pred_check
    _
  $region19: #{tpu_custom_call.1} parent=0 // pred_check_branch
    %125 = sbr.rel (0) target = $region21
  $region20: #{tpu_custom_call.1} parent=0 // pred_region
    _
  $region21: #{tpu_custom_call.1} parent=0 // pred_fallthru
    _
  // Predicated region
  $region22: #{tpu_custom_call.1} parent=0 // pred_check
    _
  $region23: #{tpu_custom_call.1} parent=0 // pred_check_branch
    %127 = sbr.rel (0) target = $region25
  $region24: #{tpu_custom_call.1} parent=0 // pred_region
    _
  $region25: #{tpu_custom_call.1} parent=0 // pred_fallthru
    _

</llo_original>
